<compile_context>
chip_gen: v7x
topology: tpu7x:2x2x1
jax: 0.10.0
libtpu: 0.0.40
codegen_flags: <defaults>
</compile_context>

<pallas_src>
import functools
import math

import jax
import jax.numpy as jnp
from jax import lax
from jax.experimental import pallas as pl
from jax.experimental.pallas import tpu as pltpu


def _sdpa_kernel(q_ref, k_ref, v_ref, ctx_ref, attn_ref, *, scale):
    # q_ref: (tq, d_k), k_ref: (len_k, d_k), v_ref: (len_k, d_v)
    # Fold the 1/sqrt(d_k) scale into Q (touches tq*d_k elems, not tq*len_k).
    q = q_ref[...] * jnp.asarray(scale, q_ref.dtype)

    # scores = Q @ K^T : contract on the last dim of both operands so K is
    # consumed in its natural [len_k, d_k] layout (no XLU transpose); the MXU
    # sees the input dtype (bf16 at full rate) with f32 accumulation.
    scores = lax.dot_general(
        q, k_ref[...],
        dimension_numbers=(((1,), (1,)), ((), ())),
        preferred_element_type=jnp.float32,
    )

    # (masked_fill in the reference is a no-op -- see module docstring note)

    # Numerically stable softmax along the key axis.
    m = jnp.max(scores, axis=-1, keepdims=True)
    e = jnp.exp(scores - m)                        # EUP
    denom = jnp.sum(e, axis=-1, keepdims=True)     # XLU reduce
    attn = e * pl.reciprocal(denom, approx=True)   # EUP vrcp (otherwise-idle slot)

    # context = attn @ V : feed the MXU in V's dtype, accumulate in f32.
    ctx = jnp.dot(attn.astype(v_ref.dtype), v_ref[...],
                  preferred_element_type=jnp.float32)

    attn_ref[...] = attn.astype(attn_ref.dtype)
    ctx_ref[...] = ctx.astype(ctx_ref.dtype)


def _choose_q_tile(len_q, len_k):
    """Query-tile size: full extent for short sequences, otherwise a multiple
    of 128 sized so the f32 (tq, len_k) scores tile stays around <= 2 MiB per
    pipeline buffer (comfortable within scoped VMEM on v5e/v6e/v7x)."""
    if len_q <= 256:
        return len_q
    budget_elems = (2 * 1024 * 1024) // 4          # ~2 MiB of f32 scores
    tq = budget_elems // max(len_k, 1)
    tq = max(128, min(512, (tq // 128) * 128))
    return min(tq, len_q)


def scaled_dot_product_attention(Q, K, V, attention_mask=None):
    """Pallas implementation of ScaledDotProductAttention.forward.

    WARNING: the attention mask is intentionally ignored to mirror the
    reference's non-in-place masked_fill (a no-op in the PyTorch module).
    """
    del attention_mask  # intentionally unused (reference masked_fill is not in-place)
    B, H, Lq, Dk = Q.shape
    Lk = K.shape[2]
    Dv = V.shape[3]
    scale = 1.0 / math.sqrt(float(Dk))

    tq = _choose_q_tile(Lq, Lk)
    n_q_tiles = pl.cdiv(Lq, tq)
    attn_dtype = Q.dtype

    kernel = functools.partial(_sdpa_kernel, scale=scale)

    grid = (B, H, n_q_tiles)
    # One (batch, head, q-tile) per grid step; K/V block index is constant in
    # the innermost axis, so their DMA is skipped for successive q-tiles.
    q_spec = pl.BlockSpec((None, None, tq, Dk), lambda b, h, qi: (b, h, qi, 0))
    k_spec = pl.BlockSpec((None, None, Lk, Dk), lambda b, h, qi: (b, h, 0, 0))
    v_spec = pl.BlockSpec((None, None, Lk, Dv), lambda b, h, qi: (b, h, 0, 0))
    ctx_spec = pl.BlockSpec((None, None, tq, Dv), lambda b, h, qi: (b, h, qi, 0))
    attn_spec = pl.BlockSpec((None, None, tq, Lk), lambda b, h, qi: (b, h, qi, 0))

    in_itemsize = jnp.dtype(Q.dtype).itemsize
    attn_itemsize = jnp.dtype(attn_dtype).itemsize

    # Rough per-step VMEM footprint (double-buffered I/O + f32 intermediates);
    # set an explicit scoped-VMEM limit with headroom, capped at 64 MiB so the
    # same value is legal on v7x (64 MiB physical VMEM per TensorCore).
    per_step = (
        2 * (tq * Dk + Lk * Dk + Lk * Dv + tq * Dv) * in_itemsize
        + 2 * tq * Lk * attn_itemsize
        + 2 * tq * Lk * 4
    )
    vmem_limit = int(min(64 * 1024 * 1024, max(32 * 1024 * 1024, 2 * per_step)))

    flops = 2 * B * H * Lq * Lk * (Dk + Dv)
    bytes_accessed = (
        Q.size * in_itemsize
        + K.size * jnp.dtype(K.dtype).itemsize
        + V.size * jnp.dtype(V.dtype).itemsize
        + B * H * Lq * Dv * in_itemsize
        + B * H * Lq * Lk * attn_itemsize
    )
    cost = pl.CostEstimate(
        flops=int(flops),
        transcendentals=int(B * H * Lq * Lk),
        bytes_accessed=int(bytes_accessed),
    )

    context, attn = pl.pallas_call(
        kernel,
        out_shape=(
            jax.ShapeDtypeStruct((B, H, Lq, Dv), Q.dtype),
            jax.ShapeDtypeStruct((B, H, Lq, Lk), attn_dtype),
        ),
        grid_spec=pltpu.PrefetchScalarGridSpec(
            num_scalar_prefetch=0,
            grid=grid,
            in_specs=[q_spec, k_spec, v_spec],
            out_specs=(ctx_spec, attn_spec),
        ),
        compiler_params=pltpu.CompilerParams(
            dimension_semantics=("parallel", "parallel", "parallel"),
            vmem_limit_bytes=vmem_limit,
        ),
        cost_estimate=cost,
    )(Q, K, V)
    return context, attn


def _reference(Q, K, V):
    Dk = K.shape[-1]
    scores = jnp.einsum("bhqd,bhkd->bhqk", Q, K) / jnp.sqrt(jnp.float32(Dk))
    attn = jax.nn.softmax(scores, axis=-1)
    context = jnp.einsum("bhqk,bhkd->bhqd", attn, V)
    return context, attn


if __name__ == "__main__":
    B, H, L, Dk, Dv = 2, 4, 8, 32, 32
    key = jax.random.PRNGKey(0)
    kq, kk, kv, km = jax.random.split(key, 4)
    Q = jax.random.normal(kq, (B, H, L, Dk), dtype=jnp.float32)
    K = jax.random.normal(kk, (B, H, L, Dk), dtype=jnp.float32)
    V = jax.random.normal(kv, (B, H, L, Dv), dtype=jnp.float32)
    attention_mask = jax.random.bernoulli(km, 0.2, (B, H, L, L))

    context, attn = scaled_dot_product_attention(Q, K, V, attention_mask)
    jax.block_until_ready((context, attn))

    ref_ctx, ref_attn = _reference(Q, K, V)
    # Tolerance accounts for the approximate (EUP) reciprocal in the softmax.
    assert jnp.allclose(context, ref_ctx, atol=2e-2, rtol=2e-2), \
        float(jnp.max(jnp.abs(context - ref_ctx)))
    assert jnp.allclose(attn, ref_attn, atol=2e-2, rtol=2e-2), \
        float(jnp.max(jnp.abs(attn - ref_attn)))

    print("KERNEL_OK")
</pallas_src>

<mosaic_0001>
module attributes {stable_mosaic.version = 11 : i64} {
  func.func @_sdpa_kernel(%arg0: i32, %arg1: i32, %arg2: i32, %arg3: memref<1x1x8x32xf32, #tpu.memory_space<vmem>>, %arg4: memref<1x1x8x32xf32, #tpu.memory_space<vmem>>, %arg5: memref<1x1x8x32xf32, #tpu.memory_space<vmem>>, %arg6: memref<1x1x8x32xf32, #tpu.memory_space<vmem>>, %arg7: memref<1x1x8x8xf32, #tpu.memory_space<vmem>>) attributes {dimension_semantics = [#tpu.dimension_semantics<parallel>, #tpu.dimension_semantics<parallel>, #tpu.dimension_semantics<parallel>], iteration_bounds = array<i64: 2, 4, 1>, scalar_prefetch = 0 : i64, scratch_operands = 0 : i64, tpu.core_type = #tpu.core_type<tc>, window_params = [{transform_indices = @transform_0, window_bounds = array<i64: 1, 1, 8, 32>}, {transform_indices = @transform_1, window_bounds = array<i64: 1, 1, 8, 32>}, {transform_indices = @transform_2, window_bounds = array<i64: 1, 1, 8, 32>}, {transform_indices = @transform_3, window_bounds = array<i64: 1, 1, 8, 32>}, {transform_indices = @transform_4, window_bounds = array<i64: 1, 1, 8, 8>}]} {
    %c0 = arith.constant 0 : index
    %c0_0 = arith.constant 0 : index
    %c0_1 = arith.constant 0 : index
    %c0_2 = arith.constant 0 : index
    %0 = vector.load %arg3[%c0, %c0_0, %c0_1, %c0_2] : memref<1x1x8x32xf32, #tpu.memory_space<vmem>>, vector<1x1x8x32xf32>
    %1 = vector.shape_cast %0 : vector<1x1x8x32xf32> to vector<8x32xf32>
    %cst = arith.constant 0.176776692 : f32
    %2 = vector.broadcast %cst : f32 to vector<8x32xf32>
    %3 = arith.mulf %1, %2 : vector<8x32xf32>
    %c0_3 = arith.constant 0 : index
    %c0_4 = arith.constant 0 : index
    %c0_5 = arith.constant 0 : index
    %c0_6 = arith.constant 0 : index
    %4 = vector.load %arg4[%c0_3, %c0_4, %c0_5, %c0_6] : memref<1x1x8x32xf32, #tpu.memory_space<vmem>>, vector<1x1x8x32xf32>
    %5 = vector.shape_cast %4 : vector<1x1x8x32xf32> to vector<8x32xf32>
    %cst_7 = arith.constant dense<0.000000e+00> : vector<8x8xf32>
    %6 = tpu.matmul %3, %5, %cst_7 {dimension_numbers = #tpu.dot_dimension_numbers<[1], [1], [0], [0], [0, 0, 1, 0], [], []>} : vector<8x32xf32>, vector<8x32xf32>, vector<8x8xf32> -> vector<8x8xf32>
    %cst_8 = arith.constant dense<0xFF800000> : vector<8xf32>
    %7 = vector.multi_reduction <maximumf>, %6, %cst_8 [1] : vector<8x8xf32> to vector<8xf32>
    %8 = vector.shape_cast %7 : vector<8xf32> to vector<8x1xf32>
    %9 = vector.broadcast %8 : vector<8x1xf32> to vector<8x8xf32>
    %10 = arith.subf %6, %9 : vector<8x8xf32>
    %11 = math.exp %10 : vector<8x8xf32>
    %cst_9 = arith.constant dense<0.000000e+00> : vector<8xf32>
    %12 = vector.multi_reduction <add>, %11, %cst_9 [1] : vector<8x8xf32> to vector<8xf32>
    %13 = vector.shape_cast %12 : vector<8xf32> to vector<8x1xf32>
    %14 = tpu.reciprocal %13 {approx = true} : vector<8x1xf32> -> vector<8x1xf32>
    %15 = vector.broadcast %14 : vector<8x1xf32> to vector<8x8xf32>
    %16 = arith.mulf %11, %15 : vector<8x8xf32>
    %c0_10 = arith.constant 0 : index
    %c0_11 = arith.constant 0 : index
    %c0_12 = arith.constant 0 : index
    %c0_13 = arith.constant 0 : index
    %17 = vector.load %arg5[%c0_10, %c0_11, %c0_12, %c0_13] : memref<1x1x8x32xf32, #tpu.memory_space<vmem>>, vector<1x1x8x32xf32>
    %18 = vector.shape_cast %17 : vector<1x1x8x32xf32> to vector<8x32xf32>
    %cst_14 = arith.constant dense<0.000000e+00> : vector<8x32xf32>
    %19 = tpu.matmul %16, %18, %cst_14 {dimension_numbers = #tpu.dot_dimension_numbers<[1], [0], [0], [1], [0, 0, 1, 1], [], []>} : vector<8x8xf32>, vector<8x32xf32>, vector<8x32xf32> -> vector<8x32xf32>
    %c0_15 = arith.constant 0 : index
    %c0_16 = arith.constant 0 : index
    %c0_17 = arith.constant 0 : index
    %c0_18 = arith.constant 0 : index
    %20 = vector.load %arg7[%c0_15, %c0_16, %c0_17, %c0_18] : memref<1x1x8x8xf32, #tpu.memory_space<vmem>>, vector<1x1x8x8xf32>
    %21 = vector.shape_cast %20 : vector<1x1x8x8xf32> to vector<8x8xf32>
    %22 = vector.shape_cast %16 : vector<8x8xf32> to vector<1x1x8x8xf32>
    tpu.vector_store %arg7[%c0_15, %c0_16, %c0_17, %c0_18], %22 {strides = array<i32>} : memref<1x1x8x8xf32, #tpu.memory_space<vmem>>, vector<1x1x8x8xf32>,
    %c0_19 = arith.constant 0 : index
    %c0_20 = arith.constant 0 : index
    %c0_21 = arith.constant 0 : index
    %c0_22 = arith.constant 0 : index
    %23 = vector.load %arg6[%c0_19, %c0_20, %c0_21, %c0_22] : memref<1x1x8x32xf32, #tpu.memory_space<vmem>>, vector<1x1x8x32xf32>
    %24 = vector.shape_cast %23 : vector<1x1x8x32xf32> to vector<8x32xf32>
    %25 = vector.shape_cast %19 : vector<8x32xf32> to vector<1x1x8x32xf32>
    tpu.vector_store %arg6[%c0_19, %c0_20, %c0_21, %c0_22], %25 {strides = array<i32>} : memref<1x1x8x32xf32, #tpu.memory_space<vmem>>, vector<1x1x8x32xf32>,
    return
  }
  func.func @transform_0(%arg0: i32, %arg1: i32, %arg2: i32) -> (i32, i32, i32, i32) {
    %c0_i32 = arith.constant 0 : i32
    %c0_i32_0 = arith.constant 0 : i32
    return %arg0, %arg1, %arg2, %c0_i32 : i32, i32, i32, i32
  }
  func.func @transform_1(%arg0: i32, %arg1: i32, %arg2: i32) -> (i32, i32, i32, i32) {
    %c0_i32 = arith.constant 0 : i32
    %c0_i32_0 = arith.constant 0 : i32
    %c0_i32_1 = arith.constant 0 : i32
    return %arg0, %arg1, %c0_i32, %c0_i32_0 : i32, i32, i32, i32
  }
  func.func @transform_2(%arg0: i32, %arg1: i32, %arg2: i32) -> (i32, i32, i32, i32) {
    %c0_i32 = arith.constant 0 : i32
    %c0_i32_0 = arith.constant 0 : i32
    %c0_i32_1 = arith.constant 0 : i32
    return %arg0, %arg1, %c0_i32, %c0_i32_0 : i32, i32, i32, i32
  }
  func.func @transform_3(%arg0: i32, %arg1: i32, %arg2: i32) -> (i32, i32, i32, i32) {
    %c0_i32 = arith.constant 0 : i32
    %c0_i32_0 = arith.constant 0 : i32
    return %arg0, %arg1, %arg2, %c0_i32 : i32, i32, i32, i32
  }
  func.func @transform_4(%arg0: i32, %arg1: i32, %arg2: i32) -> (i32, i32, i32, i32) {
    %c0_i32 = arith.constant 0 : i32
    %c0_i32_0 = arith.constant 0 : i32
    return %arg0, %arg1, %arg2, %c0_i32 : i32, i32, i32, i32
  }
}

</mosaic_0001>

<llo_original>
// kernel: tpu_custom_call.1
$region0: #{tpu_custom_call.1}
  #allocation0 [shape = 'u32[]', space=smem, size = 0x4, offset = 0x4, fixed_abs, tag = 'smem constant byte address 0x4 - core index']
  #allocation1 [shape = 'u32[144,128]{1,0:T(1,128)}', space=vmem, size = 0x12000, scoped, tag = 'internal scratch']
  %s0 = inlined_call_operand.hbm [shape: f32[2,4,8,32], index: 0, kind: input, shape index: {}]
  %s1 = inlined_call_operand.hbm [shape: f32[2,4,8,32], index: 1, kind: input, shape index: {}]
  %s2 = inlined_call_operand.hbm [shape: f32[2,4,8,32], index: 2, kind: input, shape index: {}]
  %s3 = inlined_call_operand.hbm [shape: f32[2,4,8,32], index: 3, kind: output, shape index: {0}]
  %s4 = inlined_call_operand.hbm [shape: f32[2,4,8,8], index: 4, kind: output, shape index: {1}]
  %5 = xla_tuple %s3, %s4
  %s6 = sld [smem:[#allocation0]]
  $region65: #{tpu_custom_call.1} parent=0
    _
  %s8 = ssub.s32 1, %s6
  %s9 = scalar_select 0, %s8, %s6
  $region1: #{tpu_custom_call.1} parent=0
    #allocation2 [shape = 'u8[8192]{0}', space=vmem, size = 0x2000, scoped, tag = 'input window, operand 0']
    #allocation3 [shape = 's32[2]{0}', space=sflag, size = 0x8, scoped, tag = 'scoped memory for tpu_custom_call.1']
    #allocation4 [shape = 's32[2]{0}', space=sflag, size = 0x8, scoped, tag = 'scoped memory for tpu_custom_call.1']
    #allocation5 [shape = 'u8[8192]{0}', space=vmem, size = 0x2000, scoped, tag = 'input window, operand 1']
    #allocation6 [shape = 's32[2]{0}', space=sflag, size = 0x8, scoped, tag = 'scoped memory for tpu_custom_call.1']
    #allocation7 [shape = 'u8[8192]{0}', space=vmem, size = 0x2000, scoped, tag = 'input window, operand 2']
    #allocation8 [shape = 'u8[8192]{0}', space=vmem, size = 0x2000, scoped, tag = 'output window, operand 0']
    #allocation9 [shape = 'u8[8192]{0}', space=vmem, size = 0x2000, scoped, tag = 'output window, operand 1']
    #allocation10 [shape = 's32[2]{0}', space=sflag, size = 0x8, scoped, tag = 'scoped memory for tpu_custom_call.1']
    %10 = vsyncpa [#allocation3], 0
    %s11 = scalar_lea.sflag [#allocation3], 1
    %12 = vsyncpa %s11, 0
    %13 = vsyncpa [#allocation6], 0
    %s14 = scalar_lea.sflag [#allocation6], 1
    %15 = vsyncpa %s14, 0
    %16 = vsyncpa [#allocation4], 0
    %s17 = scalar_lea.sflag [#allocation4], 1
    %18 = vsyncpa %s17, 0
    %19 = vsyncpa [#allocation10], 0
    %s20 = scalar_lea.sflag [#allocation10], 1
    %21 = vsyncpa %s20, 0
    loop: start=0, step=1, limit=10
    $region2: #{tpu_custom_call.1} parent=1 // loop_pre_header
      _
    $region3: #{tpu_custom_call.1} parent=1 // loop_header
      %s23 = sphi 0, %s27
      %p24 = scmp.ge.s32.totalorder %s23, 10
      %s30 = sphi 0, %s49
      %s31 = sphi 0, %s45
      %s32 = sphi 0, %s41
      %s33 = sphi 0, %s30
      %s34 = sphi 0, %s31
      %s35 = sphi 0, %s32
      %s36 = sphi 0, %s33
      %s37 = sphi 0, %s34
      %s38 = sphi 0, %s35
      %s56 = sphi 0, %s58
      %s59 = sphi 0, %s56
      %s60 = sphi 0, %s59
      %s76 = sphi 0, %s60
      %s84 = sphi 0, %s86
      %s87 = sphi 0, %s84
      %s88 = sphi 0, %s87
      %s104 = sphi 0, %s88
      %s112 = sphi 0, %s114
      %s115 = sphi 0, %s112
      %s116 = sphi 0, %s115
      %s132 = sphi 0, %s116
      %s142 = sphi 0, %s144
      %s145 = sphi 0, %s142
      %s146 = sphi 0, %s145
      %s162 = sphi 0, %s146
      %s172 = sphi 0, %s174
      %s175 = sphi 0, %s172
      %s176 = sphi 0, %s175
      %s192 = sphi 0, %s176
    $region4: #{tpu_custom_call.1} parent=1 // loop_header_branch
      %26 = sbr.rel (%p24) target = $region8
    $region5: #{tpu_custom_call.1} parent=1 // loop_body
      %s28 = ssub.s32 %s23, 1
      %s29 = ssub.s32 %s23, 2
      %s39 = sadd.s32 1, %s32
      %p40 = scmp.ge.s32.totalorder %s39, 1
      %s41 = scalar_select %p40, 0, %s39
      %s42 = sadd.s32 1, %s31
      %s43 = scalar_select %p40, %s42, %s31
      %p44 = scmp.ge.s32.totalorder %s43, 4
      %s45 = scalar_select %p44, 0, %s43
      %s46 = sadd.s32 1, %s30
      %s47 = scalar_select %p44, %s46, %s30
      %p48 = scmp.ge.s32.totalorder %s47, 2
      %s49 = scalar_select %p48, 0, %s47
      %s50 = ssub.s32 %s30, %s49
      %s51 = ssub.s32 %s31, %s45
      %s52 = sor.u32 %s50, %s51
      %s53 = ssub.s32 %s32, %s41
      %s54 = sor.u32 %s52, %s53
      %p55 = scmp.eq.s32.totalorder %s54, 0
      %s57 = sadd.s32 %s56, 1
      %s58 = scalar_select %p55, %s56, %s57
      %p61 = pneg %p55
      %p62 = scmp.eq.s32.totalorder %s23, 7
      %p63 = por %p61, %p62
      %p64 = scmp.ne.s32.totalorder %s56, %s59
      %p65 = scmp.eq.s32.totalorder %s23, 0
      %p66 = por %p64, %p65
      %p67 = scmp.ne.s32.totalorder %s56, %s59
      %p68 = scmp.eq.s32.totalorder %s28, 7
      %p69 = por %p67, %p68
      %p70 = scmp.ne.s32.totalorder %s59, %s60
      %p71 = scmp.eq.s32.totalorder %s28, 0
      %p72 = por %p70, %p71
      %p73 = scmp.ne.s32.totalorder %s59, %s60
      %p74 = scmp.eq.s32.totalorder %s29, 7
      %p75 = por %p73, %p74
      %p77 = scmp.ne.s32.totalorder %s60, %s76
      %p78 = scmp.eq.s32.totalorder %s29, 0
      %p79 = por %p77, %p78
      %s80 = ssub.s32 %s30, %s49
      %s81 = ssub.s32 %s31, %s45
      %s82 = sor.u32 %s80, %s81
      %p83 = scmp.eq.s32.totalorder %s82, 0
      %s85 = sadd.s32 %s84, 1
      %s86 = scalar_select %p83, %s84, %s85
      %p89 = pneg %p83
      %p90 = scmp.eq.s32.totalorder %s23, 7
      %p91 = por %p89, %p90
      %p92 = scmp.ne.s32.totalorder %s84, %s87
      %p93 = scmp.eq.s32.totalorder %s23, 0
      %p94 = por %p92, %p93
      %p95 = scmp.ne.s32.totalorder %s84, %s87
      %p96 = scmp.eq.s32.totalorder %s28, 7
      %p97 = por %p95, %p96
      %p98 = scmp.ne.s32.totalorder %s87, %s88
      %p99 = scmp.eq.s32.totalorder %s28, 0
      %p100 = por %p98, %p99
      %p101 = scmp.ne.s32.totalorder %s87, %s88
      %p102 = scmp.eq.s32.totalorder %s29, 7
      %p103 = por %p101, %p102
      %p105 = scmp.ne.s32.totalorder %s88, %s104
      %p106 = scmp.eq.s32.totalorder %s29, 0
      %p107 = por %p105, %p106
      %s108 = ssub.s32 %s30, %s49
      %s109 = ssub.s32 %s31, %s45
      %s110 = sor.u32 %s108, %s109
      %p111 = scmp.eq.s32.totalorder %s110, 0
      %s113 = sadd.s32 %s112, 1
      %s114 = scalar_select %p111, %s112, %s113
      %p117 = pneg %p111
      %p118 = scmp.eq.s32.totalorder %s23, 7
      %p119 = por %p117, %p118
      %p120 = scmp.ne.s32.totalorder %s112, %s115
      %p121 = scmp.eq.s32.totalorder %s23, 0
      %p122 = por %p120, %p121
      %p123 = scmp.ne.s32.totalorder %s112, %s115
      %p124 = scmp.eq.s32.totalorder %s28, 7
      %p125 = por %p123, %p124
      %p126 = scmp.ne.s32.totalorder %s115, %s116
      %p127 = scmp.eq.s32.totalorder %s28, 0
      %p128 = por %p126, %p127
      %p129 = scmp.ne.s32.totalorder %s115, %s116
      %p130 = scmp.eq.s32.totalorder %s29, 7
      %p131 = por %p129, %p130
      %p133 = scmp.ne.s32.totalorder %s116, %s132
      %p134 = scmp.eq.s32.totalorder %s29, 0
      %p135 = por %p133, %p134
      %s136 = ssub.s32 %s30, %s49
      %s137 = ssub.s32 %s31, %s45
      %s138 = sor.u32 %s136, %s137
      %s139 = ssub.s32 %s32, %s41
      %s140 = sor.u32 %s138, %s139
      %p141 = scmp.eq.s32.totalorder %s140, 0
      %s143 = sadd.s32 %s142, 1
      %s144 = scalar_select %p141, %s142, %s143
      %p147 = pneg %p141
      %p148 = scmp.eq.s32.totalorder %s23, 7
      %p149 = por %p147, %p148
      %p150 = scmp.ne.s32.totalorder %s142, %s145
      %p151 = scmp.eq.s32.totalorder %s23, 0
      %p152 = por %p150, %p151
      %p153 = scmp.ne.s32.totalorder %s142, %s145
      %p154 = scmp.eq.s32.totalorder %s28, 7
      %p155 = por %p153, %p154
      %p156 = scmp.ne.s32.totalorder %s145, %s146
      %p157 = scmp.eq.s32.totalorder %s28, 0
      %p158 = por %p156, %p157
      %p159 = scmp.ne.s32.totalorder %s145, %s146
      %p160 = scmp.eq.s32.totalorder %s29, 7
      %p161 = por %p159, %p160
      %p163 = scmp.ne.s32.totalorder %s146, %s162
      %p164 = scmp.eq.s32.totalorder %s29, 0
      %p165 = por %p163, %p164
      %s166 = ssub.s32 %s30, %s49
      %s167 = ssub.s32 %s31, %s45
      %s168 = sor.u32 %s166, %s167
      %s169 = ssub.s32 %s32, %s41
      %s170 = sor.u32 %s168, %s169
      %p171 = scmp.eq.s32.totalorder %s170, 0
      %s173 = sadd.s32 %s172, 1
      %s174 = scalar_select %p171, %s172, %s173
      %p177 = pneg %p171
      %p178 = scmp.eq.s32.totalorder %s23, 7
      %p179 = por %p177, %p178
      %p180 = scmp.ne.s32.totalorder %s172, %s175
      %p181 = scmp.eq.s32.totalorder %s23, 0
      %p182 = por %p180, %p181
      %p183 = scmp.ne.s32.totalorder %s172, %s175
      %p184 = scmp.eq.s32.totalorder %s28, 7
      %p185 = por %p183, %p184
      %p186 = scmp.ne.s32.totalorder %s175, %s176
      %p187 = scmp.eq.s32.totalorder %s28, 0
      %p188 = por %p186, %p187
      %p189 = scmp.ne.s32.totalorder %s175, %s176
      %p190 = scmp.eq.s32.totalorder %s29, 7
      %p191 = por %p189, %p190
      %p193 = scmp.ne.s32.totalorder %s176, %s192
      %p194 = scmp.eq.s32.totalorder %s29, 0
      %p195 = por %p193, %p194
      %p196 = scmp.le.s32.totalorder 1, %s23
      %p197 = scmp.lt.s32.totalorder %s23, 9
      %p198 = pnand %p196, %p197
      %p199 = pneg %p198
      // Predicated region
      $region9: #{tpu_custom_call.1} parent=5 // pred_check
        _
      $region10: #{tpu_custom_call.1} parent=5 // pred_check_branch
        %201 = sbr.rel (%p198) target = $region12
      $region11: #{tpu_custom_call.1} parent=5 // pred_region
        %s202 = ssub.s32 %s23, 1
      $region12: #{tpu_custom_call.1} parent=5 // pred_fallthru
        _
      %p203 = scmp.lt.s32.totalorder %s23, 8
      // Predicated region
      $region13: #{tpu_custom_call.1} parent=5 // pred_check
        %p204 = pneg %p203
      $region14: #{tpu_custom_call.1} parent=5 // pred_check_branch
        %206 = sbr.rel (%p204) target = $region16
      $region15: #{tpu_custom_call.1} parent=5 // pred_region
        // Predicated region
        $region17: #{tpu_custom_call.1} parent=15 // pred_check
          %p207 = pneg %p66
        $region18: #{tpu_custom_call.1} parent=15 // pred_check_branch
          %209 = sbr.rel (%p207) target = $region20
        $region19: #{tpu_custom_call.1} parent=15 // pred_region
          %s210 = sand.u32 %s56, 1
          %s211 = scalar_lea.sflag [#allocation3], %s210
          %s212 = sand.u32 %s56, 1
          %s213 = smul.addr %s212, 8
          %s214 = scalar_lea.vmem [#allocation2], %s213
          %s216 = ssub.s32 128, 128
          %217 = vsyncadd %s211, %s216
          %s218 = sadd.s32 %s32, %s31
          %s219 = smul.addr %s30, 4
          %s220 = sadd.s32 %s218, %s219
          %s221 = smul.addr %s220, 128
          %s222 = scalar_lea.hbm %s0, %s221
          %s224 = sshll.u32 %s214, 4
          %s225 = int_to_ptr.vmem [resolvable:$true] %s224
          %227 = dma.hbm_to_vmem [thread:$0]  %s222, 128, %s225, %s211
        $region20: #{tpu_custom_call.1} parent=15 // pred_fallthru
          _
        // Predicated region
        $region21: #{tpu_custom_call.1} parent=15 // pred_check
          %p228 = pneg %p94
        $region22: #{tpu_custom_call.1} parent=15 // pred_check_branch
          %230 = sbr.rel (%p228) target = $region24
        $region23: #{tpu_custom_call.1} parent=15 // pred_region
          %s231 = sand.u32 %s23, 1
          %s232 = scalar_lea.sflag [#allocation6], %s231
          %s233 = sand.u32 %s84, 1
          %s234 = smul.addr %s233, 8
          %s235 = scalar_lea.vmem [#allocation5], %s234
          %s237 = ssub.s32 128, 128
          %238 = vsyncadd %s232, %s237
          %s239 = smul.addr %s30, 4
          %s240 = sadd.s32 %s31, %s239
          %s241 = smul.addr %s240, 128
          %s242 = scalar_lea.hbm %s1, %s241
          %s244 = sshll.u32 %s235, 4
          %s245 = int_to_ptr.vmem [resolvable:$true] %s244
          %247 = dma.hbm_to_vmem [thread:$0]  %s242, 128, %s245, %s232
        $region24: #{tpu_custom_call.1} parent=15 // pred_fallthru
          _
        // Predicated region
        $region25: #{tpu_custom_call.1} parent=15 // pred_check
          %p248 = pneg %p122
        $region26: #{tpu_custom_call.1} parent=15 // pred_check_branch
          %250 = sbr.rel (%p248) target = $region28
        $region27: #{tpu_custom_call.1} parent=15 // pred_region
          %s251 = sand.u32 %s23, 1
          %s252 = scalar_lea.sflag [#allocation6], %s251
          %s253 = sand.u32 %s112, 1
          %s254 = smul.addr %s253, 8
          %s255 = scalar_lea.vmem [#allocation7], %s254
          %s257 = ssub.s32 128, 128
          %258 = vsyncadd %s252, %s257
          %s259 = smul.addr %s30, 4
          %s260 = sadd.s32 %s31, %s259
          %s261 = smul.addr %s260, 128
          %s262 = scalar_lea.hbm %s2, %s261
          %s264 = sshll.u32 %s255, 4
          %s265 = int_to_ptr.vmem [resolvable:$true] %s264
          %267 = dma.hbm_to_vmem [thread:$0]  %s262, 128, %s265, %s252
        $region28: #{tpu_custom_call.1} parent=15 // pred_fallthru
          _
      $region16: #{tpu_custom_call.1} parent=5 // pred_fallthru
        _
      %p268 = scmp.le.s32.totalorder 1, %s23
      %p269 = scmp.lt.s32.totalorder %s23, 9
      %p270 = pnand %p268, %p269
      %p271 = pneg %p270
      // Predicated region
      $region29: #{tpu_custom_call.1} parent=5 // pred_check
        _
      $region30: #{tpu_custom_call.1} parent=5 // pred_check_branch
        %273 = sbr.rel (%p270) target = $region32
      $region31: #{tpu_custom_call.1} parent=5 // pred_region
        %s274 = ssub.s32 %s23, 1
        %s275 = sand.u32 %s59, 1
        %s276 = scalar_lea.sflag [#allocation3], %s275
        %s277 = sand.u32 %s59, 1
        %s278 = smul.addr %s277, 8
        %s279 = scalar_lea.vmem [#allocation2], %s278
        // Predicated region
        $region33: #{tpu_custom_call.1} parent=31 // pred_check
          %p280 = pneg %p72
        $region34: #{tpu_custom_call.1} parent=31 // pred_check_branch
          %282 = sbr.rel (%p280) target = $region36
        $region35: #{tpu_custom_call.1} parent=31 // pred_region
          %283 = dma.done %s276, 128
        $region36: #{tpu_custom_call.1} parent=31 // pred_fallthru
          _
        %s284 = sand.u32 %s28, 1
        %s285 = scalar_lea.sflag [#allocation6], %s284
        %s286 = sand.u32 %s87, 1
        %s287 = smul.addr %s286, 8
        %s288 = scalar_lea.vmem [#allocation5], %s287
        // Predicated region
        $region37: #{tpu_custom_call.1} parent=31 // pred_check
          %p289 = pneg %p100
        $region38: #{tpu_custom_call.1} parent=31 // pred_check_branch
          %291 = sbr.rel (%p289) target = $region40
        $region39: #{tpu_custom_call.1} parent=31 // pred_region
          %292 = dma.done %s285, 128
        $region40: #{tpu_custom_call.1} parent=31 // pred_fallthru
          _
        %s293 = sand.u32 %s28, 1
        %s294 = scalar_lea.sflag [#allocation6], %s293
        %s295 = sand.u32 %s115, 1
        %s296 = smul.addr %s295, 8
        %s297 = scalar_lea.vmem [#allocation7], %s296
        // Predicated region
        $region41: #{tpu_custom_call.1} parent=31 // pred_check
          %p298 = pneg %p128
        $region42: #{tpu_custom_call.1} parent=31 // pred_check_branch
          %300 = sbr.rel (%p298) target = $region44
        $region43: #{tpu_custom_call.1} parent=31 // pred_region
          %301 = dma.done %s294, 128
        $region44: #{tpu_custom_call.1} parent=31 // pred_fallthru
          _
        %s302 = sand.u32 %s59, 1
        %s303 = scalar_lea.sflag [#allocation3], %s302
        %s304 = sand.u32 %s59, 1
        %s305 = smul.addr %s304, 8
        %s306 = scalar_lea.vmem [#allocation2], %s305
        %p307 = pneg %p72
        %p308 = pneg %p69
        %s309 = sand.u32 %s28, 1
        %s310 = scalar_lea.sflag [#allocation6], %s309
        %s311 = sand.u32 %s87, 1
        %s312 = smul.addr %s311, 8
        %s313 = scalar_lea.vmem [#allocation5], %s312
        %p314 = pneg %p100
        %p315 = pneg %p97
        %s316 = sand.u32 %s28, 1
        %s317 = scalar_lea.sflag [#allocation6], %s316
        %s318 = sand.u32 %s115, 1
        %s319 = smul.addr %s318, 8
        %s320 = scalar_lea.vmem [#allocation7], %s319
        %p321 = pneg %p128
        %p322 = pneg %p125
        %p323 = pneg %p158
        %p324 = pneg %p155
        %s325 = sand.u32 %s145, 1
        %s326 = scalar_lea.sflag [#allocation4], %s325
        %s327 = sand.u32 %s145, 1
        %s328 = smul.addr %s327, 8
        %s329 = scalar_lea.vmem [#allocation8], %s328
        %p330 = pneg %p188
        %p331 = pneg %p185
        %s332 = sand.u32 %s175, 1
        %s333 = scalar_lea.sflag [#allocation10], %s332
        %s334 = sand.u32 %s175, 1
        %s335 = smul.addr %s334, 8
        %s336 = scalar_lea.vmem [#allocation9], %s335
        %v337 = vld [vmem:[%s279] sm:$0xff]
        %v338 = vmul.f32 %v337, 0.17677669
        %v339 = vld [vmem:[%s288] sm:$0xff]
        %vm340 = vcmask 261120
        %v342 = vsel %vm340, %v338, 0
        %v345 = vsel %vm340, %v339, 0
        %347 = vmatprep.subr.mxu0 0.0
        %348 = vmatpush1.xpose.msra.mxu0 %v345
        %349 = vmatprep.subr.mxu0 0.0
        %350 = vmatpush1.xpose.msra.mxu0 0.0
        %351 = vmatprep.subr.mxu0 0.0
        %352 = vmatpush1.xpose.msra.mxu0 0.0
        %353 = vmatprep.subr.mxu0 0.0
        %354 = vmatpush1.xpose.msra.mxu0 0.0
        %355 = vmatprep.subr.mxu0 0.0
        %356 = vmatpush1.xpose.msra.mxu0 0.0
        %357 = vmatprep.subr.mxu0 0.0
        %358 = vmatpush1.xpose.msra.mxu0 0.0
        %359 = vmatprep.subr.mxu0 0.0
        %360 = vmatpush1.xpose.msra.mxu0 0.0
        %361 = vmatprep.subr.mxu0 0.0
        %362 = vmatpush1.xpose.msra.mxu0 0.0
        %363 = vmatprep.subr.mxu0 0.0
        %364 = vmatpush1.xpose.msra.mxu0 0.0
        %365 = vmatprep.subr.mxu0 0.0
        %366 = vmatpush1.xpose.msra.mxu0 0.0
        %367 = vmatprep.subr.mxu0 0.0
        %368 = vmatpush1.xpose.msra.mxu0 0.0
        %369 = vmatprep.subr.mxu0 0.0
        %370 = vmatpush1.xpose.msra.mxu0 0.0
        %371 = vmatprep.subr.mxu0 0.0
        %372 = vmatpush1.xpose.msra.mxu0 0.0
        %373 = vmatprep.subr.mxu0 0.0
        %374 = vmatpush1.xpose.msra.mxu0 0.0
        %375 = vmatprep.subr.mxu0 0.0
        %376 = vmatpush1.xpose.msra.mxu0 0.0
        %377 = vmatprep.subr.mxu0 0.0
        %378 = vmatpush1.xpose.msra.mxu0 0.0
        %379 = vmatprep.subr.mxu0 0.0
        %380 = vmatpush1.xpose.msra.mxu0 0.0
        %381 = vmatprep.subr.mxu0 0.0
        %382 = vmatpush1.xpose.msra.mxu0 0.0
        %383 = vmatprep.subr.mxu0 0.0
        %384 = vmatpush1.xpose.msra.mxu0 0.0
        %385 = vmatprep.subr.mxu0 0.0
        %386 = vmatpush1.xpose.msra.mxu0 0.0
        %387 = vmatprep.subr.mxu0 0.0
        %388 = vmatpush1.xpose.msra.mxu0 0.0
        %389 = vmatprep.subr.mxu0 0.0
        %390 = vmatpush1.xpose.msra.mxu0 0.0
        %391 = vmatprep.subr.mxu0 0.0
        %392 = vmatpush1.xpose.msra.mxu0 0.0
        %393 = vmatprep.subr.mxu0 0.0
        %394 = vmatpush1.xpose.msra.mxu0 0.0
        %395 = vmatprep.subr.mxu0 0.0
        %396 = vmatpush1.xpose.msra.mxu0 0.0
        %397 = vmatprep.subr.mxu0 0.0
        %398 = vmatpush1.xpose.msra.mxu0 0.0
        %399 = vmatprep.subr.mxu0 0.0
        %400 = vmatpush1.xpose.msra.mxu0 0.0
        %401 = vmatprep.subr.mxu0 0.0
        %402 = vmatpush1.xpose.msra.mxu0 0.0
        %403 = vmatprep.subr.mxu0 0.0
        %404 = vmatpush1.xpose.msra.mxu0 0.0
        %405 = vmatprep.subr.mxu0 0.0
        %406 = vmatpush1.xpose.msra.mxu0 0.0
        %407 = vmatprep.subr.mxu0 0.0
        %408 = vmatpush1.xpose.msra.mxu0 0.0
        %409 = vmatprep.subr.mxu0 0.0
        %410 = vmatpush1.xpose.msra.mxu0 0.0
        %411 = vmatprep.mubr.f32.mxu0 0.0
        %412 = vmatmul.mubr.f32.gmra.mrb[0].mxu0 %v342
        %v413 = vpop.f32.mrb[0].mxu0
        %v414 = vadd.f32 0.0, %v413
        %v415 = vpop.f32.mrb[0].mxu0
        %416 = vdwg.mxu0
        %vm417 = vcmask 64512
        %v418 = vsel %vm417, %v414, -inf
        %419 = vmax.xlane.f32.xlu0 %v418
        %v420 = vpop.xlane.xlu0 %419
        %v421 = vsub.f32 %v414, %v420
        %v422 = vmul.f32 %v421, 1.442695
        %v423 = vpow.pop %v422
        %v424 = vsel %vm417, %v423, 0.0
        %425 = vadd.xlane.f32.xlu0 %v424
        %v426 = vpop.xlane.xlu0 %425
        %v427 = vrcp.pop %v426
        %v428 = vmul.f32 %v423, %v427
        %v429 = vld [vmem:[%s297] sm:$0xff]
        %v431 = vsel %vm417, %v428, 0
        %433 = vmatprep.subr.mxu0 0.0
        %434 = vmatpush1.msra.mxu0 %v429
        %435 = vmatprep.subr.mxu0 0.0
        %436 = vmatpush1.msra.mxu0 0.0
        %437 = vmatprep.subr.mxu0 0.0
        %438 = vmatpush1.msra.mxu0 0.0
        %439 = vmatprep.subr.mxu0 0.0
        %440 = vmatpush1.msra.mxu0 0.0
        %441 = vmatprep.subr.mxu0 0.0
        %442 = vmatpush1.msra.mxu0 0.0
        %443 = vmatprep.subr.mxu0 0.0
        %444 = vmatpush1.msra.mxu0 0.0
        %445 = vmatprep.subr.mxu0 0.0
        %446 = vmatpush1.msra.mxu0 0.0
        %447 = vmatprep.subr.mxu0 0.0
        %448 = vmatpush1.msra.mxu0 0.0
        %449 = vmatprep.subr.mxu0 0.0
        %450 = vmatpush1.msra.mxu0 0.0
        %451 = vmatprep.subr.mxu0 0.0
        %452 = vmatpush1.msra.mxu0 0.0
        %453 = vmatprep.subr.mxu0 0.0
        %454 = vmatpush1.msra.mxu0 0.0
        %455 = vmatprep.subr.mxu0 0.0
        %456 = vmatpush1.msra.mxu0 0.0
        %457 = vmatprep.subr.mxu0 0.0
        %458 = vmatpush1.msra.mxu0 0.0
        %459 = vmatprep.subr.mxu0 0.0
        %460 = vmatpush1.msra.mxu0 0.0
        %461 = vmatprep.subr.mxu0 0.0
        %462 = vmatpush1.msra.mxu0 0.0
        %463 = vmatprep.subr.mxu0 0.0
        %464 = vmatpush1.msra.mxu0 0.0
        %465 = vmatprep.subr.mxu0 0.0
        %466 = vmatpush1.msra.mxu0 0.0
        %467 = vmatprep.subr.mxu0 0.0
        %468 = vmatpush1.msra.mxu0 0.0
        %469 = vmatprep.subr.mxu0 0.0
        %470 = vmatpush1.msra.mxu0 0.0
        %471 = vmatprep.subr.mxu0 0.0
        %472 = vmatpush1.msra.mxu0 0.0
        %473 = vmatprep.subr.mxu0 0.0
        %474 = vmatpush1.msra.mxu0 0.0
        %475 = vmatprep.subr.mxu0 0.0
        %476 = vmatpush1.msra.mxu0 0.0
        %477 = vmatprep.subr.mxu0 0.0
        %478 = vmatpush1.msra.mxu0 0.0
        %479 = vmatprep.subr.mxu0 0.0
        %480 = vmatpush1.msra.mxu0 0.0
        %481 = vmatprep.subr.mxu0 0.0
        %482 = vmatpush1.msra.mxu0 0.0
        %483 = vmatprep.subr.mxu0 0.0
        %484 = vmatpush1.msra.mxu0 0.0
        %485 = vmatprep.subr.mxu0 0.0
        %486 = vmatpush1.msra.mxu0 0.0
        %487 = vmatprep.subr.mxu0 0.0
        %488 = vmatpush1.msra.mxu0 0.0
        %489 = vmatprep.subr.mxu0 0.0
        %490 = vmatpush1.msra.mxu0 0.0
        %491 = vmatprep.subr.mxu0 0.0
        %492 = vmatpush1.msra.mxu0 0.0
        %493 = vmatprep.subr.mxu0 0.0
        %494 = vmatpush1.msra.mxu0 0.0
        %495 = vmatprep.subr.mxu0 0.0
        %496 = vmatpush1.msra.mxu0 0.0
        %497 = vmatprep.mubr.f32.mxu0 0.0
        %498 = vmatmul.mubr.f32.gmra.mrb[0].mxu0 %v431
        %v499 = vpop.f32.mrb[0].mxu0
        %v500 = vadd.f32 0.0, %v499
        %v501 = vpop.f32.mrb[0].mxu0
        %502 = vdwg.mxu0
        %503 = vst.msk [vmem:[%s336] sm:$0xff] %vm417, %v428
        %504 = vst.msk [vmem:[%s329] sm:$0xff] %vm340, %v500
        %s505 = sand.u32 %s145, 1
        %s506 = scalar_lea.sflag [#allocation4], %s505
        %s507 = sand.u32 %s145, 1
        %s508 = smul.addr %s507, 8
        %s509 = scalar_lea.vmem [#allocation8], %s508
        %s510 = sand.u32 %s175, 1
        %s511 = scalar_lea.sflag [#allocation10], %s510
        %s512 = sand.u32 %s175, 1
        %s513 = smul.addr %s512, 8
        %s514 = scalar_lea.vmem [#allocation9], %s513
        // Predicated region
        $region45: #{tpu_custom_call.1} parent=31 // pred_check
          %p515 = pneg %p155
        $region46: #{tpu_custom_call.1} parent=31 // pred_check_branch
          %517 = sbr.rel (%p515) target = $region48
        $region47: #{tpu_custom_call.1} parent=31 // pred_region
          %s519 = ssub.s32 128, 128
          %520 = vsyncadd %s506, %s519
          %s521 = sadd.s32 %s35, %s34
          %s522 = smul.addr %s33, 4
          %s523 = sadd.s32 %s521, %s522
          %s524 = smul.addr %s523, 128
          %s525 = scalar_lea.hbm %s3, %s524
          %s527 = sshll.u32 %s509, 4
          %s528 = int_to_ptr.vmem [resolvable:$true] %s527
          %530 = dma.vmem_to_hbm [thread:$0]  %s528, 128, %s525, %s506
        $region48: #{tpu_custom_call.1} parent=31 // pred_fallthru
          _
        // Predicated region
        $region49: #{tpu_custom_call.1} parent=31 // pred_check
          %p531 = pneg %p185
        $region50: #{tpu_custom_call.1} parent=31 // pred_check_branch
          %533 = sbr.rel (%p531) target = $region52
        $region51: #{tpu_custom_call.1} parent=31 // pred_region
          %s535 = ssub.s32 128, 128
          %536 = vsyncadd %s511, %s535
          %s537 = sadd.s32 %s35, %s34
          %s538 = smul.addr %s33, 4
          %s539 = sadd.s32 %s537, %s538
          %s540 = smul.addr %s539, 128
          %s541 = scalar_lea.hbm %s4, %s540
          %s543 = sshll.u32 %s514, 4
          %s544 = int_to_ptr.vmem [resolvable:$true] %s543
          %546 = dma.vmem_to_hbm [thread:$0]  %s544, 128, %s541, %s511
        $region52: #{tpu_custom_call.1} parent=31 // pred_fallthru
          _
      $region32: #{tpu_custom_call.1} parent=5 // pred_fallthru
        _
      %p547 = scmp.le.s32.totalorder 2, %s23
      // Predicated region
      $region53: #{tpu_custom_call.1} parent=5 // pred_check
        %p548 = pneg %p547
      $region54: #{tpu_custom_call.1} parent=5 // pred_check_branch
        %550 = sbr.rel (%p548) target = $region56
      $region55: #{tpu_custom_call.1} parent=5 // pred_region
        %s551 = ssub.s32 %s23, 2
        // Predicated region
        $region57: #{tpu_custom_call.1} parent=55 // pred_check
          %p552 = pneg %p161
        $region58: #{tpu_custom_call.1} parent=55 // pred_check_branch
          %554 = sbr.rel (%p552) target = $region60
        $region59: #{tpu_custom_call.1} parent=55 // pred_region
          %s555 = sand.u32 %s146, 1
          %s556 = scalar_lea.sflag [#allocation4], %s555
          %s557 = sand.u32 %s146, 1
          %s558 = smul.addr %s557, 8
          %s559 = scalar_lea.vmem [#allocation8], %s558
          %560 = dma.done %s556, 128
        $region60: #{tpu_custom_call.1} parent=55 // pred_fallthru
          _
        // Predicated region
        $region61: #{tpu_custom_call.1} parent=55 // pred_check
          %p561 = pneg %p191
        $region62: #{tpu_custom_call.1} parent=55 // pred_check_branch
          %563 = sbr.rel (%p561) target = $region64
        $region63: #{tpu_custom_call.1} parent=55 // pred_region
          %s564 = sand.u32 %s176, 1
          %s565 = scalar_lea.sflag [#allocation10], %s564
          %s566 = sand.u32 %s176, 1
          %s567 = smul.addr %s566, 8
          %s568 = scalar_lea.vmem [#allocation9], %s567
          %569 = dma.done %s565, 128
        $region64: #{tpu_custom_call.1} parent=55 // pred_fallthru
          _
      $region56: #{tpu_custom_call.1} parent=5 // pred_fallthru
        _
    $region6: #{tpu_custom_call.1} parent=1 // loop_footer
      %s27 = sadd.s32 1, %s23
    $region7: #{tpu_custom_call.1} parent=1 // loop_footer_branch
      %22 = sbr.rel target = $region3
    $region8: #{tpu_custom_call.1} parent=1 // loop_exit
      _
    %570 = vsyncpa [#allocation3], 1
    %s571 = scalar_lea.sflag [#allocation3], 1
    %572 = vsyncpa %s571, 1
    %573 = vsyncpa [#allocation6], 1
    %s574 = scalar_lea.sflag [#allocation6], 1
    %575 = vsyncpa %s574, 1
    %576 = vsyncpa [#allocation4], 1
    %s577 = scalar_lea.sflag [#allocation4], 1
    %578 = vsyncpa %s577, 1
    %579 = vsyncpa [#allocation10], 1
    %s580 = scalar_lea.sflag [#allocation10], 1
    %581 = vsyncpa %s580, 1

</llo_original>
